<compile_context>
chip_gen: v6e
topology: v6e:2x2x1
jax: 0.10.0
libtpu: 0.0.40
codegen_flags: <defaults>
</compile_context>

<pallas_src>
import functools
import math

import numpy as np
import jax
import jax.numpy as jnp
from jax import lax
from jax.experimental import pallas as pl
from jax.experimental.pallas import tpu as pltpu

_VMEM_LIMIT = 64 * 1024 * 1024  # fits v7x's 64 MiB physical VMEM


# ----------------------------------------------------------------------------
# helpers
# ----------------------------------------------------------------------------
def _rnd(x, m):
    return ((x + m - 1) // m) * m


def _pick_tile(padded, cap, unit, prefer=None):
    """Largest tile <= cap dividing `padded`; prefer multiples of `prefer`."""
    if prefer is not None:
        t = (min(cap, padded) // prefer) * prefer
        while t >= prefer:
            if padded % t == 0:
                return t
            t -= prefer
    t = (min(cap, padded) // unit) * unit
    while t >= unit:
        if padded % t == 0:
            return t
        t -= unit
    return padded


def _seq_pad(length):
    """Pad a sequence length to a bf16-sublane / tile friendly size."""
    return _rnd(length, 16) if length < 64 else _rnd(length, 64)


def _pad2(x, mp, np_):
    m, n = x.shape
    if (m, n) == (mp, np_):
        return x
    return jnp.pad(x, ((0, mp - m), (0, np_ - n)))


def _cparams(sem):
    return pltpu.CompilerParams(dimension_semantics=sem,
                                vmem_limit_bytes=_VMEM_LIMIT)


# ----------------------------------------------------------------------------
# Pallas kernel 1: tiled matmul, bf16 operands, f32 accumulator, fused
#                  bias (+ optional ReLU) epilogue
# ----------------------------------------------------------------------------
def _mm_kernel(a_ref, b_ref, bias_ref, o_ref, acc_ref, *, activation):
    @pl.when(pl.program_id(2) == 0)
    def _():
        acc_ref[...] = jnp.zeros_like(acc_ref)

    acc_ref[...] += jnp.dot(a_ref[...], b_ref[...],
                            preferred_element_type=jnp.float32)

    @pl.when(pl.program_id(2) == pl.num_programs(2) - 1)
    def _():
        acc = acc_ref[...] + bias_ref[...]
        if activation == "relu":
            acc = jnp.maximum(acc, 0.0)
        o_ref[...] = acc.astype(o_ref.dtype)


def pallas_matmul(a, b, bias=None, activation=None, out_dtype=jnp.bfloat16):
    """out = act(a @ b + bias). a: (M, K), b: (K, N), bias: (N,)."""
    M, K = a.shape
    K2, N = b.shape
    assert K == K2
    a = a.astype(jnp.bfloat16)
    b = b.astype(jnp.bfloat16)

    Mp, Kp, Np = _rnd(M, 16), _rnd(K, 128), _rnd(N, 128)
    tm = _pick_tile(Mp, 512, 16)
    tk = _pick_tile(Kp, 512, 128, prefer=256)
    tn = _pick_tile(Np, 512, 128, prefer=256)

    a_p = _pad2(a, Mp, Kp)
    b_p = _pad2(b, Kp, Np)
    if bias is None:
        bias = jnp.zeros((N,), jnp.float32)
    bias_p = bias.astype(jnp.float32)
    if N != Np:
        bias_p = jnp.pad(bias_p, (0, Np - N))
    bias_p = bias_p.reshape(1, Np)

    out = pl.pallas_call(
        functools.partial(_mm_kernel, activation=activation),
        out_shape=jax.ShapeDtypeStruct((Mp, Np), out_dtype),
        grid=(Mp // tm, Np // tn, Kp // tk),
        in_specs=[
            pl.BlockSpec((tm, tk), lambda i, j, k: (i, k)),
            pl.BlockSpec((tk, tn), lambda i, j, k: (k, j)),
            pl.BlockSpec((1, tn), lambda i, j, k: (0, j)),
        ],
        out_specs=pl.BlockSpec((tm, tn), lambda i, j, k: (i, j)),
        scratch_shapes=[pltpu.VMEM((tm, tn), jnp.float32)],
        compiler_params=_cparams(("parallel", "parallel", "arbitrary")),
    )(a_p, b_p, bias_p)
    if (Mp, Np) != (M, N):
        out = out[:M, :N]
    return out


# ----------------------------------------------------------------------------
# Pallas kernel 2: multi-head attention, all heads per q-tile, in-kernel mask
#   grid = (batch, q-tiles); key lengths scalar-prefetched into SMEM; q/k/v
#   are read from the concatenated projection output via last-dim block
#   indices, so no HBM head transposes and no head-dim padding.
# ----------------------------------------------------------------------------
def _mha_kernel(klen_ref, q_ref, k_ref, v_ref, o_ref, *, n_head, scale, causal):
    b = pl.program_id(0)
    qi = pl.program_id(1)
    tq = q_ref.shape[1]
    Lk = k_ref.shape[1]
    hidden = q_ref.shape[2]
    d = hidden // n_head

    klen = klen_ref[b]
    kpos = lax.broadcasted_iota(jnp.int32, (tq, Lk), 1)
    valid = kpos < klen
    if causal:
        qpos = lax.broadcasted_iota(jnp.int32, (tq, Lk), 0) + qi * tq
        valid = jnp.logical_and(valid, kpos <= qpos)

    q = q_ref[0]          # (tq, hidden) bf16
    k = k_ref[0]          # (Lk, hidden) bf16
    v = v_ref[0]          # (Lk, hidden) bf16

    outs = []
    for h in range(n_head):                      # static unroll over heads
        sl = slice(h * d, (h + 1) * d)
        s = lax.dot_general(q[:, sl], k[:, sl], (((1,), (1,)), ((), ())),
                            preferred_element_type=jnp.float32) * scale
        s = jnp.where(valid, s, -1e9)
        s = s - jnp.max(s, axis=-1, keepdims=True)
        p = jnp.exp(s)
        l = jnp.sum(p, axis=-1, keepdims=True)
        ctx = jnp.dot(p.astype(v.dtype), v[:, sl],
                      preferred_element_type=jnp.float32)
        outs.append((ctx * pl.reciprocal(l, approx=True)).astype(o_ref.dtype))
    o_ref[0] = jnp.concatenate(outs, axis=-1)    # lane-dense full-width store


def pallas_mha(q_src, kv_src, key_len, n_head, hidden,
               q_blk, k_blk, v_blk, *, causal):
    """Multi-head attention.

    q_src : (B, Lq, *) — query columns live at last-dim block `q_blk` (width
            `hidden`).  kv_src : (B, Lk, *) — key/value columns at blocks
            `k_blk` / `v_blk` (may be the same array as q_src for self-attn).
    key_len: (B,) int32 valid key lengths; keys >= key_len[b] are masked.
    Returns (B, Lq, hidden) in the concatenated-head layout.
    """
    assert hidden % 128 == 0, "hidden dim must be a multiple of 128 lanes"
    assert hidden % n_head == 0
    B, Lq, _ = q_src.shape
    Lk = kv_src.shape[1]
    tq = _pick_tile(Lq, 256, 16)
    scale = 1.0 / math.sqrt(hidden // n_head)

    # TODO(synk): for very long audio on v7x (64 MiB VMEM) switch to an
    #             Lk-blocked online-softmax (flash) accumulation; full K/V per
    #             q-tile is kept here since it is only a few hundred KiB at
    #             ASR lengths and is DMA'd once per batch.
    kernel = functools.partial(_mha_kernel, n_head=n_head, scale=scale,
                               causal=causal)
    return pl.pallas_call(
        kernel,
        out_shape=jax.ShapeDtypeStruct((B, Lq, hidden), jnp.bfloat16),
        grid_spec=pltpu.PrefetchScalarGridSpec(
            num_scalar_prefetch=1,
            grid=(B, Lq // tq),
            in_specs=[
                pl.BlockSpec((1, tq, hidden), lambda b, qi, kl: (b, qi, q_blk)),
                pl.BlockSpec((1, Lk, hidden), lambda b, qi, kl: (b, 0, k_blk)),
                pl.BlockSpec((1, Lk, hidden), lambda b, qi, kl: (b, 0, v_blk)),
            ],
            out_specs=pl.BlockSpec((1, tq, hidden),
                                   lambda b, qi, kl: (b, qi, 0)),
        ),
        compiler_params=_cparams(("parallel", "parallel")),
    )(key_len.astype(jnp.int32), q_src, kv_src, kv_src)


# ----------------------------------------------------------------------------
# Pallas kernel 3: fused FFN (relu(x@w1+b1)@w2+b2) with VMEM-resident weights
# ----------------------------------------------------------------------------
def _ffn_kernel(x_ref, w1_ref, b1_ref, w2_ref, b2_ref, o_ref):
    h = jnp.dot(x_ref[...], w1_ref[...], preferred_element_type=jnp.float32)
    h = jnp.maximum(h + b1_ref[...], 0.0).astype(jnp.bfloat16)
    o = jnp.dot(h, w2_ref[...], preferred_element_type=jnp.float32) + b2_ref[...]
    o_ref[...] = o.astype(o_ref.dtype)


def pallas_ffn(x, p):
    B, L, D = x.shape
    F = p["w1"].shape[1]
    M = B * L
    Mp = _rnd(M, 16)
    tm = _pick_tile(Mp, 256, 16)

    xm = _pad2(x.reshape(M, D).astype(jnp.bfloat16), Mp, D)
    w1 = p["w1"].astype(jnp.bfloat16)
    w2 = p["w2"].astype(jnp.bfloat16)
    b1 = p["b1"].astype(jnp.float32).reshape(1, F)
    b2 = p["b2"].astype(jnp.float32).reshape(1, D)

    out = pl.pallas_call(
        _ffn_kernel,
        out_shape=jax.ShapeDtypeStruct((Mp, D), jnp.bfloat16),
        grid=(Mp // tm,),
        in_specs=[
            pl.BlockSpec((tm, D), lambda i: (i, 0)),
            pl.BlockSpec((D, F), lambda i: (0, 0)),   # resident across tiles
            pl.BlockSpec((1, F), lambda i: (0, 0)),
            pl.BlockSpec((F, D), lambda i: (0, 0)),   # resident across tiles
            pl.BlockSpec((1, D), lambda i: (0, 0)),
        ],
        out_specs=pl.BlockSpec((tm, D), lambda i: (i, 0)),
        compiler_params=_cparams(("parallel",)),
    )(xm, w1, b1, w2, b2)
    if Mp != M:
        out = out[:M]
    return out.reshape(B, L, D)


# ----------------------------------------------------------------------------
# Pallas kernel 4: fused residual-add + LayerNorm, row-tiled, full-D blocks
# ----------------------------------------------------------------------------
def _add_ln_kernel(x_ref, r_ref, g_ref, b_ref, o_ref, *, eps):
    x = x_ref[...].astype(jnp.float32) + r_ref[...].astype(jnp.float32)
    mu = jnp.mean(x, axis=-1, keepdims=True)
    diff = x - mu
    var = jnp.mean(diff * diff, axis=-1, keepdims=True)
    y = diff * lax.rsqrt(var + eps)
    o_ref[...] = (y * g_ref[...] + b_ref[...]).astype(o_ref.dtype)


def pallas_add_layernorm(x, res, gamma, beta, eps=1e-5):
    shp = x.shape
    D = shp[-1]
    M = int(np.prod(shp[:-1]))
    Mp = _rnd(M, 16)
    tm = _pick_tile(Mp, 512, 16)

    xm = _pad2(x.reshape(M, D).astype(jnp.bfloat16), Mp, D)
    rm = _pad2(res.reshape(M, D).astype(jnp.bfloat16), Mp, D)
    g = gamma.astype(jnp.float32).reshape(1, D)
    b = beta.astype(jnp.float32).reshape(1, D)

    out = pl.pallas_call(
        functools.partial(_add_ln_kernel, eps=eps),
        out_shape=jax.ShapeDtypeStruct((Mp, D), jnp.bfloat16),
        grid=(Mp // tm,),
        in_specs=[
            pl.BlockSpec((tm, D), lambda i: (i, 0)),
            pl.BlockSpec((tm, D), lambda i: (i, 0)),
            pl.BlockSpec((1, D), lambda i: (0, 0)),
            pl.BlockSpec((1, D), lambda i: (0, 0)),
        ],
        out_specs=pl.BlockSpec((tm, D), lambda i: (i, 0)),
        compiler_params=_cparams(("parallel",)),
    )(xm, rm, g, b)
    if Mp != M:
        out = out[:M]
    return out.reshape(shp)


# ----------------------------------------------------------------------------
# VGG feature extractor
# ----------------------------------------------------------------------------
def conv3x3_relu(x_nhwc, w, b):
    """3x3 conv, stride 1, padding 1, + bias + ReLU.  w: (3, 3, Cin, Cout)."""
    # TODO(synk): uses XLA's MXU conv instead of a dedicated Pallas halo-window
    #             conv kernel; this removes the 9x im2col HBM expansion.
    y = lax.conv_general_dilated(
        x_nhwc.astype(jnp.bfloat16), w.astype(jnp.bfloat16),
        window_strides=(1, 1), padding="SAME",
        dimension_numbers=("NHWC", "HWIO", "NHWC"),
        preferred_element_type=jnp.float32)
    return jnp.maximum(y + b, 0.0).astype(jnp.bfloat16)


def maxpool2x2(x):
    B, H, W, C = x.shape
    return x.reshape(B, H // 2, 2, W // 2, 2, C).max(axis=(2, 4))


def vgg_extractor(p, x):
    """x: (B, T, F) -> (B, T//4, hidden_dim) in bf16."""
    x = x[..., None]                                           # NHWC, C=1
    x = conv3x3_relu(x, p["c1_w"], p["c1_b"])
    x = conv3x3_relu(x, p["c2_w"], p["c2_b"])
    x = maxpool2x2(x)
    x = conv3x3_relu(x, p["c3_w"], p["c3_b"])
    x = conv3x3_relu(x, p["c4_w"], p["c4_b"])
    x = maxpool2x2(x)                                          # (B, T/4, F/4, 128)
    B, T4, F4, C = x.shape
    # PyTorch: (B,C,T,F).transpose(1,2).view(B,T,C*F) -> feature order (c, f)
    x = jnp.transpose(x, (0, 1, 3, 2)).reshape(B, T4, C * F4)
    x = pallas_matmul(x.reshape(B * T4, C * F4), p["lin_w"], p["lin_b"])
    return x.reshape(B, T4, -1)


# ----------------------------------------------------------------------------
# Transformer building blocks
# ----------------------------------------------------------------------------
def sinusoid_pos_encoding(length, dim):
    pos = np.arange(length)[:, None].astype(np.float64)
    i = np.arange(dim)[None, :].astype(np.float64)
    angle = pos / np.power(10000.0, (2.0 * (i // 2)) / dim)
    pe = np.zeros((length, dim))
    pe[:, 0::2] = np.sin(angle[:, 0::2])
    pe[:, 1::2] = np.cos(angle[:, 1::2])
    return jnp.asarray(pe, jnp.float32)


def multi_head_self_attention(p, x, key_len, n_head, causal):
    B, L, D = x.shape
    qkv = pallas_matmul(x.reshape(B * L, D), p["w_qkv"], p["b_qkv"])
    qkv = qkv.reshape(B, L, 3 * D)
    ctx = pallas_mha(qkv, qkv, key_len, n_head, D, 0, 1, 2, causal=causal)
    out = pallas_matmul(ctx.reshape(B * L, D), p["wo"], p["bo"])
    return out.reshape(B, L, D)


def multi_head_cross_attention(p, x, enc_out, enc_len, n_head):
    B, Lq, D = x.shape
    Lk = enc_out.shape[1]
    q = pallas_matmul(x.reshape(B * Lq, D), p["wq"], p["bq"]).reshape(B, Lq, D)
    kv = pallas_matmul(enc_out.reshape(B * Lk, D), p["w_kv"], p["b_kv"])
    kv = kv.reshape(B, Lk, 2 * D)
    ctx = pallas_mha(q, kv, enc_len, n_head, D, 0, 0, 1, causal=False)
    out = pallas_matmul(ctx.reshape(B * Lq, D), p["wo"], p["bo"])
    return out.reshape(B, Lq, D)


def encoder_layer(p, x, enc_len, n_head):
    a = multi_head_self_attention(p["mha"], x, enc_len, n_head, causal=False)
    x = pallas_add_layernorm(a, x, p["ln1_g"], p["ln1_b"])
    f = pallas_ffn(x, p["ffn"])
    x = pallas_add_layernorm(f, x, p["ln2_g"], p["ln2_b"])
    return x


def decoder_layer(p, x, dec_len, enc_out, enc_len, n_head):
    a = multi_head_self_attention(p["self"], x, dec_len, n_head, causal=True)
    x = pallas_add_layernorm(a, x, p["ln1_g"], p["ln1_b"])
    c = multi_head_cross_attention(p["cross"], x, enc_out, enc_len, n_head)
    x = pallas_add_layernorm(c, x, p["ln2_g"], p["ln2_b"])
    f = pallas_ffn(x, p["ffn"])
    x = pallas_add_layernorm(f, x, p["ln3_g"], p["ln3_b"])
    return x


def encoder_forward(p, feats, enc_len, n_head):
    B, T, D = feats.shape
    Lp = _seq_pad(T)
    x = feats.astype(jnp.float32) + sinusoid_pos_encoding(T, D)[None]
    if Lp != T:
        x = jnp.pad(x, ((0, 0), (0, Lp - T), (0, 0)))
    x = x.astype(jnp.bfloat16)                     # dropout = identity (eval)
    for lp in p["layers"]:
        x = encoder_layer(lp, x, enc_len, n_head)
    return x                                       # (B, Lp, D); pads masked via enc_len


def decoder_forward(p, tgt_in, enc_out, enc_len, n_head, out_dim):
    B, U = tgt_in.shape
    D = p["embed"].shape[1]
    Up = _seq_pad(U)
    x = p["embed"][tgt_in] * math.sqrt(D)
    x = x + sinusoid_pos_encoding(U, D)[None]
    if Up != U:
        x = jnp.pad(x, ((0, 0), (0, Up - U), (0, 0)))
    x = x.astype(jnp.bfloat16)
    # pad->eos replacement in make_in_out means the pad component of the target
    # mask is empty: decoder self-attn mask is purely causal (built in-kernel).
    dec_len = jnp.full((B,), U, jnp.int32)
    for lp in p["layers"]:
        x = decoder_layer(lp, x, dec_len, enc_out, enc_len, n_head)
    logits = pallas_matmul(x.reshape(B * Up, D), p["out_w"], p["out_b"],
                           out_dtype=jnp.float32)
    return logits.reshape(B, Up, out_dim)[:, :U]


# ----------------------------------------------------------------------------
# target pre-processing (mirrors kosr utilities, host-side)
# ----------------------------------------------------------------------------
def make_in_out(tgt, pad_id, sos_id, eos_id):
    btz = tgt.shape[0]
    tgt_in = tgt.copy()
    tgt_in[tgt_in == pad_id] = eos_id
    tgt_in = tgt_in.reshape(btz, -1)[:, :-1]
    tgt_out = tgt[tgt != sos_id].reshape(btz, -1)
    return tgt_in, tgt_out


# ----------------------------------------------------------------------------
# parameter initialization (deterministic; mirrors Transformer.initialize())
# ----------------------------------------------------------------------------
def xavier(key, shape, fan_in, fan_out):
    limit = math.sqrt(6.0 / (fan_in + fan_out))
    return jax.random.uniform(key, shape, jnp.float32, -limit, limit)


def init_mha(key, d):
    ks = jax.random.split(key, 4)
    z = jnp.zeros((d,), jnp.float32)
    wq = xavier(ks[0], (d, d), d, d)
    wk = xavier(ks[1], (d, d), d, d)
    wv = xavier(ks[2], (d, d), d, d)
    wo = xavier(ks[3], (d, d), d, d)
    return {
        "wq": wq, "bq": z,
        "w_kv": jnp.concatenate([wk, wv], axis=1),
        "b_kv": jnp.zeros((2 * d,), jnp.float32),
        "w_qkv": jnp.concatenate([wq, wk, wv], axis=1),
        "b_qkv": jnp.zeros((3 * d,), jnp.float32),
        "wo": wo, "bo": z,
    }


def init_ffn(key, d, f):
    k1, k2 = jax.random.split(key)
    return {
        "w1": xavier(k1, (d, f), d, f), "b1": jnp.zeros((f,), jnp.float32),
        "w2": xavier(k2, (f, d), f, d), "b2": jnp.zeros((d,), jnp.float32),
    }


def init_enc_layer(key, d, f):
    k1, k2 = jax.random.split(key)
    one, zero = jnp.ones((d,), jnp.float32), jnp.zeros((d,), jnp.float32)
    return {"mha": init_mha(k1, d), "ffn": init_ffn(k2, d, f),
            "ln1_g": one, "ln1_b": zero, "ln2_g": one, "ln2_b": zero}


def init_dec_layer(key, d, f):
    k1, k2, k3 = jax.random.split(key, 3)
    one, zero = jnp.ones((d,), jnp.float32), jnp.zeros((d,), jnp.float32)
    return {"self": init_mha(k1, d), "cross": init_mha(k2, d),
            "ffn": init_ffn(k3, d, f),
            "ln1_g": one, "ln1_b": zero, "ln2_g": one, "ln2_b": zero,
            "ln3_g": one, "ln3_b": zero}


def init_params(key, out_dim, in_dim, hidden_dim, filter_dim,
                enc_n_layers, dec_n_layers):
    keys = jax.random.split(key, 16)
    ch = [(1, 64), (64, 64), (64, 128), (128, 128)]
    vgg = {}
    for i, (ci, co) in enumerate(ch):
        vgg[f"c{i+1}_w"] = xavier(keys[i], (3, 3, ci, co), ci * 9, co * 9)
        vgg[f"c{i+1}_b"] = jnp.zeros((co,), jnp.float32)
    lin_in = 128 * (in_dim // 4)
    vgg["lin_w"] = xavier(keys[4], (lin_in, hidden_dim), lin_in, hidden_dim)
    vgg["lin_b"] = jnp.zeros((hidden_dim,), jnp.float32)

    enc_keys = jax.random.split(keys[5], enc_n_layers)
    enc = {"layers": [init_enc_layer(k, hidden_dim, filter_dim) for k in enc_keys]}

    dec_keys = jax.random.split(keys[6], dec_n_layers)
    dec = {
        "embed": jax.random.normal(keys[7], (out_dim, hidden_dim), jnp.float32),
        "layers": [init_dec_layer(k, hidden_dim, filter_dim) for k in dec_keys],
        "out_w": xavier(keys[8], (hidden_dim, out_dim), hidden_dim, out_dim),
        "out_b": jnp.zeros((out_dim,), jnp.float32),
    }
    return {"vgg": vgg, "enc": enc, "dec": dec}


# ----------------------------------------------------------------------------
# full Transformer.forward
# ----------------------------------------------------------------------------
def transformer_forward(params, inputs, input_length, tgt, *,
                        n_head, out_dim, pad_id=0, sos_id=1, eos_id=2):
    # feature extractor + input_length >> 2
    feats = vgg_extractor(params["vgg"], inputs)
    enc_len = jnp.asarray(np.asarray(input_length) >> 2, jnp.int32)

    enc_out = encoder_forward(params["enc"], feats, enc_len, n_head)

    tgt_in, golds = make_in_out(np.asarray(tgt), pad_id, sos_id, eos_id)
    preds = decoder_forward(params["dec"], jnp.asarray(tgt_in), enc_out,
                            enc_len, n_head, out_dim)
    return preds, jnp.asarray(golds)


# TODO(synk): recognize()/greedy_search()/beam_search() autoregressive decode
# loops are host-side control flow and are not ported; only forward() is.

# ----------------------------------------------------------------------------
# demo
# ----------------------------------------------------------------------------
if __name__ == "__main__":
    # small config consistent with the module (head dim 64 like the real model)
    OUT_DIM, IN_DIM = 10, 16
    HIDDEN, FILTER, N_HEAD = 128, 256, 2
    ENC_LAYERS, DEC_LAYERS = 2, 2
    PAD, SOS, EOS = 0, 1, 2

    key = jax.random.PRNGKey(0)
    k_in, k_par = jax.random.split(key)

    B, T = 2, 16
    inputs = jax.random.normal(k_in, (B, T, IN_DIM), jnp.float32)
    input_length = np.array([16, 12], dtype=np.int32)
    tgt = np.array([[SOS, 5, 6, 7, 3, 4, EOS, PAD],
                    [SOS, 4, 3, EOS, PAD, PAD, PAD, PAD]], dtype=np.int32)

    params = init_params(k_par, OUT_DIM, IN_DIM, HIDDEN, FILTER,
                         ENC_LAYERS, DEC_LAYERS)

    preds, golds = transformer_forward(
        params, inputs, input_length, tgt,
        n_head=N_HEAD, out_dim=OUT_DIM, pad_id=PAD, sos_id=SOS, eos_id=EOS)

    jax.block_until_ready(preds)
    assert preds.shape == (B, tgt.shape[1] - 1, OUT_DIM)
    assert golds.shape == (B, tgt.shape[1] - 1)
    assert bool(jnp.all(jnp.isfinite(preds)))
    print("KERNEL_OK")
</pallas_src>

<mosaic_0001>
module attributes {stable_mosaic.version = 11 : i64} {
  func.func @_mm_kernel(%arg0: i32, %arg1: i32, %arg2: i32, %arg3: memref<16x512xbf16, #tpu.memory_space<vmem>>, %arg4: memref<512x128xbf16, #tpu.memory_space<vmem>>, %arg5: memref<1x128xf32, #tpu.memory_space<vmem>>, %arg6: memref<16x128xbf16, #tpu.memory_space<vmem>>, %arg7: memref<16x128xf32, #tpu.memory_space<vmem>>) attributes {dimension_semantics = [#tpu.dimension_semantics<parallel>, #tpu.dimension_semantics<parallel>, #tpu.dimension_semantics<arbitrary>], iteration_bounds = array<i64: 1, 1, 1>, scalar_prefetch = 0 : i64, scratch_operands = 1 : i64, tpu.core_type = #tpu.core_type<tc>, window_params = [{transform_indices = @transform_0, window_bounds = array<i64: 16, 512>}, {transform_indices = @transform_1, window_bounds = array<i64: 512, 128>}, {transform_indices = @transform_2, window_bounds = array<i64: 1, 128>}, {transform_indices = @transform_3, window_bounds = array<i64: 16, 128>}]} {
    %c0_i32 = arith.constant 0 : i32
    %0 = arith.cmpi eq, %arg2, %c0_i32 : i32
    %1 = arith.extui %0 : i1 to i32
    %c0_i32_0 = arith.constant 0 : i32
    %2 = arith.cmpi ne, %1, %c0_i32_0 : i32
    scf.if %2 {
      %cst_10 = arith.constant 0.000000e+00 : f32
      %12 = vector.broadcast %cst_10 : f32 to vector<16x128xf32>
      %c0_11 = arith.constant 0 : index
      %c0_12 = arith.constant 0 : index
      %13 = vector.load %arg7[%c0_11, %c0_12] : memref<16x128xf32, #tpu.memory_space<vmem>>, vector<16x128xf32>
      tpu.vector_store %arg7[%c0_11, %c0_12], %12 {strides = array<i32>} : memref<16x128xf32, #tpu.memory_space<vmem>>, vector<16x128xf32>,
    } else {
    }
    %c0 = arith.constant 0 : index
    %c0_1 = arith.constant 0 : index
    %3 = vector.load %arg7[%c0, %c0_1] : memref<16x128xf32, #tpu.memory_space<vmem>>, vector<16x128xf32>
    %c0_2 = arith.constant 0 : index
    %c0_3 = arith.constant 0 : index
    %4 = vector.load %arg3[%c0_2, %c0_3] : memref<16x512xbf16, #tpu.memory_space<vmem>>, vector<16x512xbf16>
    %c0_4 = arith.constant 0 : index
    %c0_5 = arith.constant 0 : index
    %5 = vector.load %arg4[%c0_4, %c0_5] : memref<512x128xbf16, #tpu.memory_space<vmem>>, vector<512x128xbf16>
    %cst = arith.constant dense<0.000000e+00> : vector<16x128xf32>
    %6 = tpu.matmul %4, %5, %cst {dimension_numbers = #tpu.dot_dimension_numbers<[1], [0], [0], [1], [0, 0, 1, 1], [], []>} : vector<16x512xbf16>, vector<512x128xbf16>, vector<16x128xf32> -> vector<16x128xf32>
    %7 = arith.addf %3, %6 : vector<16x128xf32>
    %c0_6 = arith.constant 0 : index
    %c0_7 = arith.constant 0 : index
    %8 = vector.load %arg7[%c0_6, %c0_7] : memref<16x128xf32, #tpu.memory_space<vmem>>, vector<16x128xf32>
    tpu.vector_store %arg7[%c0_6, %c0_7], %7 {strides = array<i32>} : memref<16x128xf32, #tpu.memory_space<vmem>>, vector<16x128xf32>,
    %c0_i32_8 = arith.constant 0 : i32
    %9 = arith.cmpi eq, %arg2, %c0_i32_8 : i32
    %10 = arith.extui %9 : i1 to i32
    %c0_i32_9 = arith.constant 0 : i32
    %11 = arith.cmpi ne, %10, %c0_i32_9 : i32
    scf.if %11 {
      %c0_10 = arith.constant 0 : index
      %c0_11 = arith.constant 0 : index
      %12 = vector.load %arg7[%c0_10, %c0_11] : memref<16x128xf32, #tpu.memory_space<vmem>>, vector<16x128xf32>
      %c0_12 = arith.constant 0 : index
      %c0_13 = arith.constant 0 : index
      %13 = vector.load %arg5[%c0_12, %c0_13] : memref<1x128xf32, #tpu.memory_space<vmem>>, vector<1x128xf32>
      %14 = vector.broadcast %13 : vector<1x128xf32> to vector<16x128xf32>
      %15 = arith.addf %12, %14 : vector<16x128xf32>
      %16 = arith.truncf %15 : vector<16x128xf32> to vector<16x128xbf16>
      %c0_14 = arith.constant 0 : index
      %c0_15 = arith.constant 0 : index
      %17 = vector.load %arg6[%c0_14, %c0_15] : memref<16x128xbf16, #tpu.memory_space<vmem>>, vector<16x128xbf16>
      tpu.vector_store %arg6[%c0_14, %c0_15], %16 {strides = array<i32>} : memref<16x128xbf16, #tpu.memory_space<vmem>>, vector<16x128xbf16>,
    } else {
    }
    return
  }
  func.func @transform_0(%arg0: i32, %arg1: i32, %arg2: i32) -> (i32, i32) {
    %c0_i32 = arith.constant 0 : i32
    return %arg0, %arg2 : i32, i32
  }
  func.func @transform_1(%arg0: i32, %arg1: i32, %arg2: i32) -> (i32, i32) {
    %c0_i32 = arith.constant 0 : i32
    return %arg2, %arg1 : i32, i32
  }
  func.func @transform_2(%arg0: i32, %arg1: i32, %arg2: i32) -> (i32, i32) {
    %c0_i32 = arith.constant 0 : i32
    %c0_i32_0 = arith.constant 0 : i32
    return %c0_i32, %arg1 : i32, i32
  }
  func.func @transform_3(%arg0: i32, %arg1: i32, %arg2: i32) -> (i32, i32) {
    %c0_i32 = arith.constant 0 : i32
    return %arg0, %arg1 : i32, i32
  }
}

</mosaic_0001>

<llo_original>
// kernel: tpu_custom_call.1
$region0: #{tpu_custom_call.1}
  #allocation0 [shape = 'u32[]', space=smem, size = 0x4, offset = 0x4, fixed_abs, tag = 'smem constant byte address 0x4 - core index']
  #allocation1 [shape = 'u32[144,128]{1,0:T(1,128)}', space=vmem, size = 0x12000, scoped, tag = 'internal scratch']
  #allocation2 [shape = 'f32[16,128]{1,0:T(8,128)}', space=vmem, size = 0x2000, scoped, tag = 'scratch operand']
  %s0 = inlined_call_operand.hbm [shape: bf16[16,512], index: 0, kind: input, shape index: {}]
  %s1 = inlined_call_operand.hbm [shape: bf16[512,128], index: 1, kind: input, shape index: {}]
  %s2 = inlined_call_operand.vmem [shape: f32[1,128], index: 2, kind: input, shape index: {}]
  %s3 = inlined_call_operand.hbm [shape: bf16[16,128], index: 3, kind: output, shape index: {}]
  %s4 = sld [smem:[#allocation0]]
  $region38: #{tpu_custom_call.1} parent=0
    _
  %s6 = ssub.s32 1, %s4
  %s7 = scalar_select 0, %s6, %s4
  $region1: #{tpu_custom_call.1} parent=0
    #allocation3 [shape = 'u8[16384]{0}', space=vmem, size = 0x4000, scoped, tag = 'input window, operand 0, single buffered']
    #allocation4 [shape = 's32[1]{0}', space=sflag, size = 0x4, scoped, tag = 'scoped memory for tpu_custom_call.1']
    #allocation5 [shape = 's32[1]{0}', space=sflag, size = 0x4, scoped, tag = 'scoped memory for tpu_custom_call.1']
    #allocation6 [shape = 'u8[131072]{0}', space=vmem, size = 0x20000, scoped, tag = 'input window, operand 1, single buffered']
    #allocation7 [shape = 's32[1]{0}', space=sflag, size = 0x4, scoped, tag = 'scoped memory for tpu_custom_call.1']
    #allocation8 [shape = 'u8[4096]{0}', space=vmem, size = 0x1000, scoped, tag = 'output window, operand 0, single buffered']
    %8 = vsyncpa [#allocation4], 0
    %9 = vsyncpa [#allocation7], 0
    %10 = vsyncpa [#allocation5], 0
    // Predicated region
    $region2: #{tpu_custom_call.1} parent=1 // pred_check
      _
    $region3: #{tpu_custom_call.1} parent=1 // pred_check_branch
      %12 = sbr.rel (0) target = $region5
    $region4: #{tpu_custom_call.1} parent=1 // pred_region
      %s14 = ssub.s32 512, 512
      %15 = vsyncadd [#allocation4], %s14
      %s16 = sshll.u32 [#allocation3], 4
      %s17 = int_to_ptr.vmem [resolvable:$true] %s16
      %22 = dma.hbm_to_vmem [thread:$0]  %s0, 512, %s17, [#allocation4], 256, 256, 16
    $region5: #{tpu_custom_call.1} parent=1 // pred_fallthru
      _
    // Predicated region
    $region6: #{tpu_custom_call.1} parent=1 // pred_check
      _
    $region7: #{tpu_custom_call.1} parent=1 // pred_check_branch
      %24 = sbr.rel (0) target = $region9
    $region8: #{tpu_custom_call.1} parent=1 // pred_region
      %s26 = ssub.s32 4096, 4096
      %27 = vsyncadd [#allocation7], %s26
      %s28 = sshll.u32 [#allocation6], 4
      %s29 = int_to_ptr.vmem [resolvable:$true] %s28
      %34 = dma.hbm_to_vmem [thread:$0]  %s1, 4096, %s29, [#allocation7], 64, 64, 4
    $region9: #{tpu_custom_call.1} parent=1 // pred_fallthru
      _
    // Predicated region
    $region10: #{tpu_custom_call.1} parent=1 // pred_check
      _
    $region11: #{tpu_custom_call.1} parent=1 // pred_check_branch
      %36 = sbr.rel (0) target = $region13
    $region12: #{tpu_custom_call.1} parent=1 // pred_region
      _
    $region13: #{tpu_custom_call.1} parent=1 // pred_fallthru
      _
    // Predicated region
    $region14: #{tpu_custom_call.1} parent=1 // pred_check
      _
    $region15: #{tpu_custom_call.1} parent=1 // pred_check_branch
      %38 = sbr.rel (0) target = $region17
    $region16: #{tpu_custom_call.1} parent=1 // pred_region
      %39 = dma.done [#allocation4], 512
    $region17: #{tpu_custom_call.1} parent=1 // pred_fallthru
      _
    // Predicated region
    $region18: #{tpu_custom_call.1} parent=1 // pred_check
      _
    $region19: #{tpu_custom_call.1} parent=1 // pred_check_branch
      %41 = sbr.rel (0) target = $region21
    $region20: #{tpu_custom_call.1} parent=1 // pred_region
      %42 = dma.done [#allocation7], 4096
    $region21: #{tpu_custom_call.1} parent=1 // pred_fallthru
      _
    %p44 = scmp.eq.s32.totalorder 0, 0
    // Predicated region
    $region22: #{tpu_custom_call.1} parent=1 // pred_check
      %p45 = pneg %p44
    $region23: #{tpu_custom_call.1} parent=1 // pred_check_branch
      %47 = sbr.rel (%p45) target = $region25
    $region24: #{tpu_custom_call.1} parent=1 // pred_region
      %48 = vst [vmem:[#allocation2] sm:$0xff] 0.0
      %49 = vst [vmem:[#allocation2 + $0x8] sm:$0xff] 0.0
    $region25: #{tpu_custom_call.1} parent=1 // pred_fallthru
      _
    %v50 = vld [vmem:[#allocation2] sm:$0xff]
    %v51 = vld [vmem:[#allocation2 + $0x8] sm:$0xff]
    %v52 = vld [vmem:[#allocation3] sm:$0xff]
    %v53 = vld [vmem:[#allocation3 + $0x8] sm:$0xff]
    %v54 = vld [vmem:[#allocation3 + $0x10] sm:$0xff]
    %v55 = vld [vmem:[#allocation3 + $0x18] sm:$0xff]
    %v56 = vld [vmem:[#allocation6] sm:$0xf]
    %v57 = vld [vmem:[#allocation6 + $0x4] sm:$0xf]
    %v58 = vld [vmem:[#allocation6 + $0x8] sm:$0xf]
    %v59 = vld [vmem:[#allocation6 + $0xc] sm:$0xf]
    %v60 = vld [vmem:[#allocation6 + $0x10] sm:$0xf]
    %v61 = vld [vmem:[#allocation6 + $0x14] sm:$0xf]
    %v62 = vld [vmem:[#allocation6 + $0x18] sm:$0xf]
    %v63 = vld [vmem:[#allocation6 + $0x1c] sm:$0xf]
    %v64 = vld [vmem:[#allocation6 + $0x20] sm:$0xf]
    %v65 = vld [vmem:[#allocation6 + $0x24] sm:$0xf]
    %v66 = vld [vmem:[#allocation6 + $0x28] sm:$0xf]
    %v67 = vld [vmem:[#allocation6 + $0x2c] sm:$0xf]
    %v68 = vld [vmem:[#allocation6 + $0x30] sm:$0xf]
    %v69 = vld [vmem:[#allocation6 + $0x34] sm:$0xf]
    %v70 = vld [vmem:[#allocation6 + $0x38] sm:$0xf]
    %v71 = vld [vmem:[#allocation6 + $0x3c] sm:$0xf]
    %v72 = vld [vmem:[#allocation6 + $0x40] sm:$0xf]
    %v73 = vld [vmem:[#allocation6 + $0x44] sm:$0xf]
    %v74 = vld [vmem:[#allocation6 + $0x48] sm:$0xf]
    %v75 = vld [vmem:[#allocation6 + $0x4c] sm:$0xf]
    %v76 = vld [vmem:[#allocation6 + $0x50] sm:$0xf]
    %v77 = vld [vmem:[#allocation6 + $0x54] sm:$0xf]
    %v78 = vld [vmem:[#allocation6 + $0x58] sm:$0xf]
    %v79 = vld [vmem:[#allocation6 + $0x5c] sm:$0xf]
    %v80 = vld [vmem:[#allocation6 + $0x60] sm:$0xf]
    %v81 = vld [vmem:[#allocation6 + $0x64] sm:$0xf]
    %v82 = vld [vmem:[#allocation6 + $0x68] sm:$0xf]
    %v83 = vld [vmem:[#allocation6 + $0x6c] sm:$0xf]
    %v84 = vld [vmem:[#allocation6 + $0x70] sm:$0xf]
    %v85 = vld [vmem:[#allocation6 + $0x74] sm:$0xf]
    %v86 = vld [vmem:[#allocation6 + $0x78] sm:$0xf]
    %v87 = vld [vmem:[#allocation6 + $0x7c] sm:$0xf]
    %v88 = vld [vmem:[#allocation6 + $0x80] sm:$0xf]
    %v89 = vld [vmem:[#allocation6 + $0x84] sm:$0xf]
    %v90 = vld [vmem:[#allocation6 + $0x88] sm:$0xf]
    %v91 = vld [vmem:[#allocation6 + $0x8c] sm:$0xf]
    %v92 = vld [vmem:[#allocation6 + $0x90] sm:$0xf]
    %v93 = vld [vmem:[#allocation6 + $0x94] sm:$0xf]
    %v94 = vld [vmem:[#allocation6 + $0x98] sm:$0xf]
    %v95 = vld [vmem:[#allocation6 + $0x9c] sm:$0xf]
    %v96 = vld [vmem:[#allocation6 + $0xa0] sm:$0xf]
    %v97 = vld [vmem:[#allocation6 + $0xa4] sm:$0xf]
    %v98 = vld [vmem:[#allocation6 + $0xa8] sm:$0xf]
    %v99 = vld [vmem:[#allocation6 + $0xac] sm:$0xf]
    %v100 = vld [vmem:[#allocation6 + $0xb0] sm:$0xf]
    %v101 = vld [vmem:[#allocation6 + $0xb4] sm:$0xf]
    %v102 = vld [vmem:[#allocation6 + $0xb8] sm:$0xf]
    %v103 = vld [vmem:[#allocation6 + $0xbc] sm:$0xf]
    %v104 = vld [vmem:[#allocation6 + $0xc0] sm:$0xf]
    %v105 = vld [vmem:[#allocation6 + $0xc4] sm:$0xf]
    %v106 = vld [vmem:[#allocation6 + $0xc8] sm:$0xf]
    %v107 = vld [vmem:[#allocation6 + $0xcc] sm:$0xf]
    %v108 = vld [vmem:[#allocation6 + $0xd0] sm:$0xf]
    %v109 = vld [vmem:[#allocation6 + $0xd4] sm:$0xf]
    %v110 = vld [vmem:[#allocation6 + $0xd8] sm:$0xf]
    %v111 = vld [vmem:[#allocation6 + $0xdc] sm:$0xf]
    %v112 = vld [vmem:[#allocation6 + $0xe0] sm:$0xf]
    %v113 = vld [vmem:[#allocation6 + $0xe4] sm:$0xf]
    %v114 = vld [vmem:[#allocation6 + $0xe8] sm:$0xf]
    %v115 = vld [vmem:[#allocation6 + $0xec] sm:$0xf]
    %v116 = vld [vmem:[#allocation6 + $0xf0] sm:$0xf]
    %v117 = vld [vmem:[#allocation6 + $0xf4] sm:$0xf]
    %v118 = vld [vmem:[#allocation6 + $0xf8] sm:$0xf]
    %v119 = vld [vmem:[#allocation6 + $0xfc] sm:$0xf]
    %v124 = vunpack.c.l.b16 %v52
    %v125 = vunpack.c.h.b16 %v52
    %v126 = vunpack.c.l.b16 %v53
    %v127 = vunpack.c.h.b16 %v53
    %v128 = vunpack.c.l.b16 %v54
    %v129 = vunpack.c.h.b16 %v54
    %v130 = vunpack.c.l.b16 %v55
    %v131 = vunpack.c.h.b16 %v55
    %v132 = vpack.c.b16 %v128, %v124
    %v133 = vpack.c.b16 %v129, %v125
    %v134 = vpack.c.b16 %v130, %v126
    %v135 = vpack.c.b16 %v131, %v127
    %v204 = vunpack.c.l.b16 %v56
    %v205 = vunpack.c.l.b16 %v57
    %v206 = vunpack.c.l.b16 %v58
    %v207 = vunpack.c.l.b16 %v59
    %v208 = vunpack.c.l.b16 %v60
    %v209 = vunpack.c.l.b16 %v61
    %v210 = vunpack.c.l.b16 %v62
    %v211 = vunpack.c.l.b16 %v63
    %v212 = vunpack.c.l.b16 %v64
    %v213 = vunpack.c.l.b16 %v65
    %v214 = vunpack.c.l.b16 %v66
    %v215 = vunpack.c.l.b16 %v67
    %v216 = vunpack.c.l.b16 %v68
    %v217 = vunpack.c.l.b16 %v69
    %v218 = vunpack.c.l.b16 %v70
    %v219 = vunpack.c.l.b16 %v71
    %v220 = vunpack.c.l.b16 %v72
    %v221 = vunpack.c.l.b16 %v73
    %v222 = vunpack.c.l.b16 %v74
    %v223 = vunpack.c.l.b16 %v75
    %v224 = vunpack.c.l.b16 %v76
    %v225 = vunpack.c.l.b16 %v77
    %v226 = vunpack.c.l.b16 %v78
    %v227 = vunpack.c.l.b16 %v79
    %v228 = vunpack.c.l.b16 %v80
    %v229 = vunpack.c.l.b16 %v81
    %v230 = vunpack.c.l.b16 %v82
    %v231 = vunpack.c.l.b16 %v83
    %v232 = vunpack.c.l.b16 %v84
    %v233 = vunpack.c.l.b16 %v85
    %v234 = vunpack.c.l.b16 %v86
    %v235 = vunpack.c.l.b16 %v87
    %v236 = vunpack.c.l.b16 %v88
    %v237 = vunpack.c.l.b16 %v89
    %v238 = vunpack.c.l.b16 %v90
    %v239 = vunpack.c.l.b16 %v91
    %v240 = vunpack.c.l.b16 %v92
    %v241 = vunpack.c.l.b16 %v93
    %v242 = vunpack.c.l.b16 %v94
    %v243 = vunpack.c.l.b16 %v95
    %v244 = vunpack.c.l.b16 %v96
    %v245 = vunpack.c.l.b16 %v97
    %v246 = vunpack.c.l.b16 %v98
    %v247 = vunpack.c.l.b16 %v99
    %v248 = vunpack.c.l.b16 %v100
    %v249 = vunpack.c.l.b16 %v101
    %v250 = vunpack.c.l.b16 %v102
    %v251 = vunpack.c.l.b16 %v103
    %v252 = vunpack.c.l.b16 %v104
    %v253 = vunpack.c.l.b16 %v105
    %v254 = vunpack.c.l.b16 %v106
    %v255 = vunpack.c.l.b16 %v107
    %v256 = vunpack.c.l.b16 %v108
    %v257 = vunpack.c.l.b16 %v109
    %v258 = vunpack.c.l.b16 %v110
    %v259 = vunpack.c.l.b16 %v111
    %v260 = vunpack.c.l.b16 %v112
    %v261 = vunpack.c.l.b16 %v113
    %v262 = vunpack.c.l.b16 %v114
    %v263 = vunpack.c.l.b16 %v115
    %v264 = vunpack.c.l.b16 %v116
    %v265 = vunpack.c.l.b16 %v117
    %v266 = vunpack.c.l.b16 %v118
    %v267 = vunpack.c.l.b16 %v119
    %v268 = vpack.c.b16 %v205, %v204
    %v269 = vpack.c.b16 %v207, %v206
    %v270 = vpack.c.b16 %v209, %v208
    %v271 = vpack.c.b16 %v211, %v210
    %v272 = vpack.c.b16 %v213, %v212
    %v273 = vpack.c.b16 %v215, %v214
    %v274 = vpack.c.b16 %v217, %v216
    %v275 = vpack.c.b16 %v219, %v218
    %v276 = vpack.c.b16 %v221, %v220
    %v277 = vpack.c.b16 %v223, %v222
    %v278 = vpack.c.b16 %v225, %v224
    %v279 = vpack.c.b16 %v227, %v226
    %v280 = vpack.c.b16 %v229, %v228
    %v281 = vpack.c.b16 %v231, %v230
    %v282 = vpack.c.b16 %v233, %v232
    %v283 = vpack.c.b16 %v235, %v234
    %v284 = vpack.c.b16 %v237, %v236
    %v285 = vpack.c.b16 %v239, %v238
    %v286 = vpack.c.b16 %v241, %v240
    %v287 = vpack.c.b16 %v243, %v242
    %v288 = vpack.c.b16 %v245, %v244
    %v289 = vpack.c.b16 %v247, %v246
    %v290 = vpack.c.b16 %v249, %v248
    %v291 = vpack.c.b16 %v251, %v250
    %v292 = vpack.c.b16 %v253, %v252
    %v293 = vpack.c.b16 %v255, %v254
    %v294 = vpack.c.b16 %v257, %v256
    %v295 = vpack.c.b16 %v259, %v258
    %v296 = vpack.c.b16 %v261, %v260
    %v297 = vpack.c.b16 %v263, %v262
    %v298 = vpack.c.b16 %v265, %v264
    %v299 = vpack.c.b16 %v267, %v266
    %332 = vmatprep.subr.bf16.mxu0 0
    %333 = vmatpush1.bf16.msra.mxu0 %v275
    %334 = vmatprep.subr.bf16.mxu0 0
    %335 = vmatpush1.bf16.msra.mxu0 %v274
    %336 = vmatprep.subr.bf16.mxu0 0
    %337 = vmatpush1.bf16.msra.mxu0 %v273
    %338 = vmatprep.subr.bf16.mxu0 0
    %339 = vmatpush1.bf16.msra.mxu0 %v272
    %340 = vmatprep.subr.bf16.mxu0 0
    %341 = vmatpush1.bf16.msra.mxu0 %v271
    %342 = vmatprep.subr.bf16.mxu0 0
    %343 = vmatpush1.bf16.msra.mxu0 %v270
    %344 = vmatprep.subr.bf16.mxu0 0
    %345 = vmatpush1.bf16.msra.mxu0 %v269
    %346 = vmatprep.subr.bf16.mxu0 0
    %347 = vmatpush1.bf16.msra.mxu0 %v268
    %348 = vmatprep.subr.bf16.mxu0 0
    %349 = vmatpush2.bf16.msra.mxu0 %v283
    %350 = vmatprep.subr.bf16.mxu0 0
    %351 = vmatpush2.bf16.msra.mxu0 %v282
    %352 = vmatprep.subr.bf16.mxu0 0
    %353 = vmatpush2.bf16.msra.mxu0 %v281
    %354 = vmatprep.subr.bf16.mxu0 0
    %355 = vmatpush2.bf16.msra.mxu0 %v280
    %356 = vmatprep.subr.bf16.mxu0 0
    %357 = vmatpush2.bf16.msra.mxu0 %v279
    %358 = vmatprep.subr.bf16.mxu0 0
    %359 = vmatpush2.bf16.msra.mxu0 %v278
    %360 = vmatprep.subr.bf16.mxu0 0
    %361 = vmatpush2.bf16.msra.mxu0 %v277
    %362 = vmatprep.subr.bf16.mxu0 0
    %363 = vmatpush2.bf16.msra.mxu0 %v276
    %364 = vmatprep.mubr.bf16.mxu0 %v133
    %365 = vmatmul.mubr.bf16.gmra.mxu0 %v132
    %v366 = vpop.f32.mrf.mxu0
    %v367 = vadd.f32 0.0, %v366
    %v368 = vpop.f32.mrf.mxu0
    %v369 = vpop.f32.mrf.mxu0
    %v370 = vadd.f32 0.0, %v369
    %v371 = vpop.f32.mrf.mxu0
    %372 = vdwg.mxu0
    %373 = vmatprep.subr.bf16.mxu0 0
    %374 = vmatpush1.bf16.msra.mxu0 %v291
    %375 = vmatprep.subr.bf16.mxu0 0
    %376 = vmatpush1.bf16.msra.mxu0 %v290
    %377 = vmatprep.subr.bf16.mxu0 0
    %378 = vmatpush1.bf16.msra.mxu0 %v289
    %379 = vmatprep.subr.bf16.mxu0 0
    %380 = vmatpush1.bf16.msra.mxu0 %v288
    %381 = vmatprep.subr.bf16.mxu0 0
    %382 = vmatpush1.bf16.msra.mxu0 %v287
    %383 = vmatprep.subr.bf16.mxu0 0
    %384 = vmatpush1.bf16.msra.mxu0 %v286
    %385 = vmatprep.subr.bf16.mxu0 0
    %386 = vmatpush1.bf16.msra.mxu0 %v285
    %387 = vmatprep.subr.bf16.mxu0 0
    %388 = vmatpush1.bf16.msra.mxu0 %v284
    %389 = vmatprep.subr.bf16.mxu0 0
    %390 = vmatpush2.bf16.msra.mxu0 %v299
    %391 = vmatprep.subr.bf16.mxu0 0
    %392 = vmatpush2.bf16.msra.mxu0 %v298
    %393 = vmatprep.subr.bf16.mxu0 0
    %394 = vmatpush2.bf16.msra.mxu0 %v297
    %395 = vmatprep.subr.bf16.mxu0 0
    %396 = vmatpush2.bf16.msra.mxu0 %v296
    %397 = vmatprep.subr.bf16.mxu0 0
    %398 = vmatpush2.bf16.msra.mxu0 %v295
    %399 = vmatprep.subr.bf16.mxu0 0
    %400 = vmatpush2.bf16.msra.mxu0 %v294
    %401 = vmatprep.subr.bf16.mxu0 0
    %402 = vmatpush2.bf16.msra.mxu0 %v293
    %403 = vmatprep.subr.bf16.mxu0 0
    %404 = vmatpush2.bf16.msra.mxu0 %v292
    %405 = vmatprep.mubr.bf16.mxu0 %v135
    %406 = vmatmul.mubr.bf16.gmra.mxu0 %v134
    %v407 = vpop.f32.mrf.mxu0
    %v408 = vadd.f32 %v367, %v407
    %v409 = vpop.f32.mrf.mxu0
    %v410 = vpop.f32.mrf.mxu0
    %v411 = vadd.f32 %v370, %v410
    %v412 = vpop.f32.mrf.mxu0
    %413 = vdwg.mxu0
    %v414 = vadd.f32 %v50, %v408
    %v415 = vadd.f32 %v51, %v411
    %416 = vst [vmem:[#allocation2] sm:$0xff] %v414
    %417 = vst [vmem:[#allocation2 + $0x8] sm:$0xff] %v415
    // Predicated region
    $region26: #{tpu_custom_call.1} parent=1 // pred_check
      %p418 = pneg %p44
    $region27: #{tpu_custom_call.1} parent=1 // pred_check_branch
      %420 = sbr.rel (%p418) target = $region29
    $region28: #{tpu_custom_call.1} parent=1 // pred_region
      %v421 = vld [vmem:[#allocation2] sm:$0xff]
      %v422 = vld [vmem:[#allocation2 + $0x8] sm:$0xff]
      %v423 = vld [vmem:[%s2] sm:$0x1]
      %v425 = vlaneseq
      %v426 = vshrl.u32 %v425, 7
      %v427 = vsub.s32 0, %v426
      %v428 = vrot.slane %v423, %v427
      %v430 = vadd.f32 %v421, %v428
      %v431 = vadd.f32 %v422, %v428
      %v432 = vpack.c.bf16 %v431, %v430
      %v434 = vunpack.c.l.b16 %v432
      %v435 = vunpack.c.h.b16 %v432
      %v436 = vpack.c.b16 %v434, %v434
      %v437 = vpack.c.b16 %v435, %v435
      %440 = vst [vmem:[#allocation8] sm:$0xf] %v436
      %441 = vst [vmem:[#allocation8 + $0x4] sm:$0xf] %v437
    $region29: #{tpu_custom_call.1} parent=1 // pred_fallthru
      _
    // Predicated region
    $region30: #{tpu_custom_call.1} parent=1 // pred_check
      _
    $region31: #{tpu_custom_call.1} parent=1 // pred_check_branch
      %443 = sbr.rel (0) target = $region33
    $region32: #{tpu_custom_call.1} parent=1 // pred_region
      %s445 = ssub.s32 128, 128
      %446 = vsyncadd [#allocation5], %s445
      %s447 = sshll.u32 [#allocation8], 4
      %s448 = int_to_ptr.vmem [resolvable:$true] %s447
      %453 = dma.vmem_to_hbm [thread:$0]  %s448, 128, %s3, [#allocation5], 64, 64, 4
    $region33: #{tpu_custom_call.1} parent=1 // pred_fallthru
      _
    // Predicated region
    $region34: #{tpu_custom_call.1} parent=1 // pred_check
      _
    $region35: #{tpu_custom_call.1} parent=1 // pred_check_branch
      %455 = sbr.rel (0) target = $region37
    $region36: #{tpu_custom_call.1} parent=1 // pred_region
      %456 = dma.done [#allocation5], 128
    $region37: #{tpu_custom_call.1} parent=1 // pred_fallthru
      _
    %457 = vsyncpa [#allocation4], 1
    %458 = vsyncpa [#allocation7], 1
    %459 = vsyncpa [#allocation5], 1

</llo_original>
